<compile_context>
chip_gen: v7x
topology: tpu7x:2x2x1
jax: 0.10.0
libtpu: 0.0.40
codegen_flags: <defaults>
</compile_context>

<pallas_src>
import jax
import jax.numpy as jnp
from jax import lax
from jax.experimental import pallas as pl
from jax.experimental.pallas import tpu as pltpu


def _categorical_kernel(logp_ref, u_ref, tri_ref, out_ref):
    # logp_ref: (TB, N) f32 VMEM | u_ref: (TB, 1) f32 VMEM
    # tri_ref:  (N, N) bf16 VMEM (resident)      | out_ref: (TB, 1) i32 VMEM
    logp = logp_ref[...].astype(jnp.float32)
    _, N = logp.shape

    # Row-max subtraction keeps exp() finite even for unnormalized log_p; the
    # constant factor cancels in the u * total comparison below.
    m = jnp.max(logp, axis=-1, keepdims=True)
    p = jnp.exp(logp - m)                                     # (TB, N), in (0, 1]

    # Inclusive cumulative sum along classes on the MXU:
    #   c[:, j] = sum_{k <= j} p[:, k]
    # bf16 operands (the ones matrix is exact in bf16), f32 accumulation.
    c = jnp.dot(p.astype(jnp.bfloat16), tri_ref[...],
                preferred_element_type=jnp.float32)           # (TB, N)

    total = c[:, N - 1:N]                                     # (TB, 1) == sum(p)
    thresh = u_ref[...] * total                               # (TB, 1), in [0, total)

    # Sampled index = first j with c[j] > thresh == count of c <= thresh.
    idx = jnp.sum((c <= thresh).astype(jnp.int32), axis=-1, keepdims=True)
    out_ref[...] = jnp.minimum(idx, N - 1)                    # float-equality safety clamp


def _round_up(x, m):
    return ((x + m - 1) // m) * m


def categorical_sample(log_p, key):
    """Pallas equivalent of Categorical.forward(log_p): one multinomial draw per row."""
    B, N = log_p.shape

    # Batch tile: multiple of 8 sublanes; large (<=512 rows) to amortize the
    # ~0.35us per-grid-step overhead while keeping the double-buffered logp
    # tile + temporaries well under v7x's 64 MiB physical VMEM.
    TB = min(512, _round_up(B, 8))
    num_tiles = pl.cdiv(B, TB)
    Bp = num_tiles * TB

    logp_p = log_p.astype(jnp.float32)
    if Bp != B:
        logp_p = jnp.pad(logp_p, ((0, Bp - B), (0, 0)))       # padded rows discarded

    # One uniform per (padded) row.
    # TODO(synk): on TPU-only builds draw these in-kernel via
    # pltpu.prng_seed(seed + pl.program_id(0)) + pltpu.prng_random_bits((TB, 128));
    # kept host-side here because prng_seed has no CPU/interpret lowering.
    u = jax.random.uniform(key, (Bp, 1), dtype=jnp.float32)

    # Upper-triangular ones matrix (tri[k, j] = 1 iff k <= j), built once and
    # kept VMEM-resident across all grid steps, in bf16 for the MXU.
    # TODO(synk): for large N (>~2K classes) replace the dense NxN cumsum matmul
    # with a class-tiled running cumsum or Gumbel-max argmax (O(B*N), no NxN buffer).
    row = lax.broadcasted_iota(jnp.int32, (N, N), 0)
    col = lax.broadcasted_iota(jnp.int32, (N, N), 1)
    tri = (row <= col).astype(jnp.bfloat16)

    compiler_params = None
    if jax.default_backend() == "tpu":
        compiler_params = pltpu.CompilerParams(
            dimension_semantics=("parallel",))

    out = pl.pallas_call(
        _categorical_kernel,
        out_shape=jax.ShapeDtypeStruct((Bp, 1), jnp.int32),
        grid=(num_tiles,),
        in_specs=[
            pl.BlockSpec((TB, N), lambda i: (i, 0)),   # log_p batch tile
            pl.BlockSpec((TB, 1), lambda i: (i, 0)),   # uniforms batch tile
            pl.BlockSpec((N, N), lambda i: (0, 0)),    # tri: resident across steps
        ],
        out_specs=pl.BlockSpec((TB, 1), lambda i: (i, 0)),
        compiler_params=compiler_params,
    )(logp_p, u, tri)

    # TODO(synk): torch returns int64 (.long()); JAX default index dtype is int32.
    return out[:B, 0]                                         # squeeze(1) -> (B,)


if __name__ == "__main__":
    key = jax.random.PRNGKey(0)
    k_logits, k_sample = jax.random.split(key)

    B, N = 8, 16
    logits = jax.random.normal(k_logits, (B, N), dtype=jnp.float32)
    log_p = jax.nn.log_softmax(logits, axis=-1)               # valid log-probabilities

    samples = categorical_sample(log_p, k_sample)
    samples = jax.block_until_ready(samples)

    assert samples.shape == (B,)
    assert samples.dtype == jnp.int32
    assert bool(jnp.all(samples >= 0)) and bool(jnp.all(samples < N))
    print("KERNEL_OK")
</pallas_src>

<mosaic_0001>
module attributes {stable_mosaic.version = 11 : i64} {
  func.func @_categorical_kernel(%arg0: i32, %arg1: memref<8x16xf32, #tpu.memory_space<vmem>>, %arg2: memref<8x1xf32, #tpu.memory_space<vmem>>, %arg3: memref<16x16xbf16, #tpu.memory_space<vmem>>, %arg4: memref<8x1xi32, #tpu.memory_space<vmem>>) attributes {dimension_semantics = [#tpu.dimension_semantics<arbitrary>], iteration_bounds = array<i64: 1>, scalar_prefetch = 0 : i64, scratch_operands = 0 : i64, tpu.core_type = #tpu.core_type<tc>, window_params = [{transform_indices = @transform_0, window_bounds = array<i64: 8, 16>}, {transform_indices = @transform_1, window_bounds = array<i64: 8, 1>}, {pipeline_mode = #tpu.pipeline_mode<synchronous>, transform_indices = @transform_2, window_bounds = array<i64: 16, 16>}, {transform_indices = @transform_3, window_bounds = array<i64: 8, 1>}]} {
    %c0 = arith.constant 0 : index
    %c0_0 = arith.constant 0 : index
    %0 = vector.load %arg1[%c0, %c0_0] : memref<8x16xf32, #tpu.memory_space<vmem>>, vector<8x16xf32>
    %cst = arith.constant dense<0xFF800000> : vector<8xf32>
    %1 = vector.multi_reduction <maximumf>, %0, %cst [1] : vector<8x16xf32> to vector<8xf32>
    %2 = vector.shape_cast %1 : vector<8xf32> to vector<8x1xf32>
    %3 = vector.broadcast %2 : vector<8x1xf32> to vector<8x16xf32>
    %4 = arith.subf %0, %3 : vector<8x16xf32>
    %5 = math.exp %4 : vector<8x16xf32>
    %6 = arith.truncf %5 : vector<8x16xf32> to vector<8x16xbf16>
    %c0_1 = arith.constant 0 : index
    %c0_2 = arith.constant 0 : index
    %7 = vector.load %arg3[%c0_1, %c0_2] : memref<16x16xbf16, #tpu.memory_space<vmem>>, vector<16x16xbf16>
    %cst_3 = arith.constant dense<0.000000e+00> : vector<8x16xf32>
    %8 = tpu.matmul %6, %7, %cst_3 {dimension_numbers = #tpu.dot_dimension_numbers<[1], [0], [0], [1], [0, 0, 1, 1], [], []>} : vector<8x16xbf16>, vector<16x16xbf16>, vector<8x16xf32> -> vector<8x16xf32>
    %9 = vector.extract_strided_slice %8 {offsets = [0, 15], sizes = [8, 1], strides = [1, 1]} : vector<8x16xf32> to vector<8x1xf32>
    %c0_4 = arith.constant 0 : index
    %c0_5 = arith.constant 0 : index
    %10 = vector.load %arg2[%c0_4, %c0_5] : memref<8x1xf32, #tpu.memory_space<vmem>>, vector<8x1xf32>
    %11 = arith.mulf %10, %9 : vector<8x1xf32>
    %12 = vector.broadcast %11 : vector<8x1xf32> to vector<8x16xf32>
    %13 = arith.cmpf ole, %8, %12 : vector<8x16xf32>
    %14 = arith.extui %13 : vector<8x16xi1> to vector<8x16xi32>
    %cst_6 = arith.constant dense<0> : vector<8xi32>
    %15 = vector.multi_reduction <add>, %14, %cst_6 [1] : vector<8x16xi32> to vector<8xi32>
    %16 = vector.shape_cast %15 : vector<8xi32> to vector<8x1xi32>
    %c15_i32 = arith.constant 15 : i32
    %17 = vector.broadcast %c15_i32 : i32 to vector<8x1xi32>
    %18 = arith.minsi %16, %17 : vector<8x1xi32>
    %c0_7 = arith.constant 0 : index
    %c0_8 = arith.constant 0 : index
    %19 = vector.load %arg4[%c0_7, %c0_8] : memref<8x1xi32, #tpu.memory_space<vmem>>, vector<8x1xi32>
    tpu.vector_store %arg4[%c0_7, %c0_8], %18 {strides = array<i32>} : memref<8x1xi32, #tpu.memory_space<vmem>>, vector<8x1xi32>,
    return
  }
  func.func @transform_0(%arg0: i32) -> (i32, i32) {
    %c0_i32 = arith.constant 0 : i32
    %c0_i32_0 = arith.constant 0 : i32
    return %arg0, %c0_i32 : i32, i32
  }
  func.func @transform_1(%arg0: i32) -> (i32, i32) {
    %c0_i32 = arith.constant 0 : i32
    %c0_i32_0 = arith.constant 0 : i32
    return %arg0, %c0_i32 : i32, i32
  }
  func.func @transform_2(%arg0: i32) -> (i32, i32) {
    %c0_i32 = arith.constant 0 : i32
    %c0_i32_0 = arith.constant 0 : i32
    %c0_i32_1 = arith.constant 0 : i32
    return %c0_i32, %c0_i32_0 : i32, i32
  }
  func.func @transform_3(%arg0: i32) -> (i32, i32) {
    %c0_i32 = arith.constant 0 : i32
    %c0_i32_0 = arith.constant 0 : i32
    return %arg0, %c0_i32 : i32, i32
  }
}

</mosaic_0001>

<llo_original>
// kernel: tpu_custom_call.1
$region0: #{tpu_custom_call.1}
  #allocation0 [shape = 'u32[]', space=smem, size = 0x4, offset = 0x4, fixed_abs, tag = 'smem constant byte address 0x4 - core index']
  #allocation1 [shape = 'u32[144,128]{1,0:T(1,128)}', space=vmem, size = 0x12000, scoped, tag = 'internal scratch']
  %s0 = inlined_call_operand.vmem [shape: f32[8,16], index: 0, kind: input, shape index: {}]
  %s1 = inlined_call_operand.vmem [shape: f32[8,1], index: 1, kind: input, shape index: {}]
  %s2 = inlined_call_operand.vmem [shape: bf16[16,16], index: 2, kind: input, shape index: {}]
  %s3 = inlined_call_operand.vmem [shape: s32[8,1], index: 3, kind: output, shape index: {}]
  %s4 = sld [smem:[#allocation0]]
  $region22: #{tpu_custom_call.1} parent=0
    _
  %s6 = ssub.s32 1, %s4
  %s7 = scalar_select 0, %s6, %s4
  // Predicated region
  $region2: #{tpu_custom_call.1} parent=0 // pred_check
    _
  $region3: #{tpu_custom_call.1} parent=0 // pred_check_branch
    %9 = sbr.rel (0) target = $region5
  $region4: #{tpu_custom_call.1} parent=0 // pred_region
    _
  $region5: #{tpu_custom_call.1} parent=0 // pred_fallthru
    _
  // Predicated region
  $region6: #{tpu_custom_call.1} parent=0 // pred_check
    _
  $region7: #{tpu_custom_call.1} parent=0 // pred_check_branch
    %11 = sbr.rel (0) target = $region9
  $region8: #{tpu_custom_call.1} parent=0 // pred_region
    _
  $region9: #{tpu_custom_call.1} parent=0 // pred_fallthru
    _
  // Predicated region
  $region10: #{tpu_custom_call.1} parent=0 // pred_check
    _
  $region11: #{tpu_custom_call.1} parent=0 // pred_check_branch
    %13 = sbr.rel (0) target = $region13
  $region12: #{tpu_custom_call.1} parent=0 // pred_region
    _
  $region13: #{tpu_custom_call.1} parent=0 // pred_fallthru
    _
  %v15 = vld [vmem:[%s0] sm:$0xff]
  %vm16 = vcmask 130048
  %v17 = vsel %vm16, %v15, -inf
  %18 = vmax.xlane.f32.xlu0 %v17
  %v19 = vpop.xlane.xlu0 %18
  %v20 = vsub.f32 %v15, %v19
  %v21 = vmul.f32 %v20, 1.442695
  %v22 = vpow.pop %v21
  %v23 = vpack.c.bf16 %v22, %v22
  %v24 = vld [vmem:[%s2] sm:$0xf]
  %v25 = vld [vmem:[%s2 + $0x4] sm:$0xf]
  %v28 = vunpack.c.l.b16 %v24
  %v29 = vunpack.c.l.b16 %v25
  %v30 = vpack.c.b16 %v29, %v28
  %v33 = vsel %vm16, %v23, 0
  %35 = vmatprep.subr.bf16.mxu0 0
  %36 = vmatpush1.bf16.msra.mxu0 %v30
  %37 = vmatprep.subr.bf16.mxu0 0
  %38 = vmatpush1.bf16.msra.mxu0 0
  %39 = vmatprep.subr.bf16.mxu0 0
  %40 = vmatpush1.bf16.msra.mxu0 0
  %41 = vmatprep.subr.bf16.mxu0 0
  %42 = vmatpush1.bf16.msra.mxu0 0
  %43 = vmatprep.subr.bf16.mxu0 0
  %44 = vmatpush1.bf16.msra.mxu0 0
  %45 = vmatprep.subr.bf16.mxu0 0
  %46 = vmatpush1.bf16.msra.mxu0 0
  %47 = vmatprep.subr.bf16.mxu0 0
  %48 = vmatpush1.bf16.msra.mxu0 0
  %49 = vmatprep.subr.bf16.mxu0 0
  %50 = vmatpush1.bf16.msra.mxu0 0
  %51 = vmatprep.subr.bf16.mxu0 0
  %52 = vmatpush1.bf16.msra.mxu0 0
  %53 = vmatprep.subr.bf16.mxu0 0
  %54 = vmatpush1.bf16.msra.mxu0 0
  %55 = vmatprep.subr.bf16.mxu0 0
  %56 = vmatpush1.bf16.msra.mxu0 0
  %57 = vmatprep.subr.bf16.mxu0 0
  %58 = vmatpush1.bf16.msra.mxu0 0
  %59 = vmatprep.subr.bf16.mxu0 0
  %60 = vmatpush1.bf16.msra.mxu0 0
  %61 = vmatprep.subr.bf16.mxu0 0
  %62 = vmatpush1.bf16.msra.mxu0 0
  %63 = vmatprep.subr.bf16.mxu0 0
  %64 = vmatpush1.bf16.msra.mxu0 0
  %65 = vmatprep.subr.bf16.mxu0 0
  %66 = vmatpush1.bf16.msra.mxu0 0
  %67 = vmatprep.mubr.bf16.mxu0 0
  %68 = vmatmul.mubr.bf16.gmra.mrb[0].mxu0 %v33
  %v69 = vpop.f32.mrb[0].mxu0
  %v70 = vadd.f32 0.0, %v69
  %v71 = vpop.f32.mrb[0].mxu0
  %v72 = vpop.f32.mrb[0].mxu0
  %v73 = vpop.f32.mrb[0].mxu0
  %74 = vdwg.mxu0
  %v75 = vld [vmem:[%s1] sm:$0xff]
  %77 = vrot.lane.b32.xlu0 %v70, 113
  %v78 = vpop.permute.xlu0 %77
  %v80 = vmul.f32 %v75, %v78
  %82 = vset.pattern.permute.xlu0 0
  %83 = vperm.xlu0 %82, %v80
  %v84 = vpop.permute.xlu0 %83
  %vm86 = vcmp.le.f32.partialorder %v70, %v84
  %v87 = vsel %vm86, 1, 0
  %v88 = vsel %vm16, %v87, 0
  %v89 = vand.u32 %v88, 65535
  %v90 = vshrl.u32 %v88, 16
  %v91 = vcvt.s32.f32 %v89
  %v92 = vcvt.s32.f32 %v90
  %93 = vadd.xlane.f32.xlu0 %v91
  %v94 = vpop.xlane.xlu0 %93
  %95 = vadd.xlane.f32.xlu0 %v92
  %v96 = vpop.xlane.xlu0 %95
  %v97 = vcvt.f32.s32 %v94
  %v98 = vcvt.f32.s32 %v96
  %v99 = vshll.u32 %v98, 16
  %v100 = vadd.s32 %v99, %v97
  %vm101 = vcmp.lt.s32.totalorder %v100, 15
  %v102 = vsel %vm101, %v100, 15
  %vm103 = vcmask 7168
  %104 = vst.msk [vmem:[%s3] sm:$0xff] %vm103, %v102
  // Predicated region
  $region14: #{tpu_custom_call.1} parent=0 // pred_check
    _
  $region15: #{tpu_custom_call.1} parent=0 // pred_check_branch
    %106 = sbr.rel (0) target = $region17
  $region16: #{tpu_custom_call.1} parent=0 // pred_region
    _
  $region17: #{tpu_custom_call.1} parent=0 // pred_fallthru
    _
  // Predicated region
  $region18: #{tpu_custom_call.1} parent=0 // pred_check
    _
  $region19: #{tpu_custom_call.1} parent=0 // pred_check_branch
    %108 = sbr.rel (0) target = $region21
  $region20: #{tpu_custom_call.1} parent=0 // pred_region
    _
  $region21: #{tpu_custom_call.1} parent=0 // pred_fallthru
    _

</llo_original>
